<compile_context>
chip_gen: v5e
topology: v5e:2x2
jax: 0.10.0
libtpu: 0.0.40
codegen_flags: <defaults>
</compile_context>

<pallas_src>
import functools

import numpy as np
import jax
import jax.numpy as jnp
from jax import lax
from jax.experimental import pallas as pl
from jax.experimental.pallas import tpu as pltpu


# ---------------------------------------------------------------------------
# Fused NT-Xent kernel
# ---------------------------------------------------------------------------
def _ntxent_fused_kernel(zrow_ref, zcol_ref, out_ref, m_sc, l_sc, pos_sc, *,
                         half, inv_temp, inv_scale, tr, tc, eps):
    i = pl.program_id(0)          # row tile
    j = pl.program_id(1)          # col tile (reduction axis, innermost)

    @pl.when(j == 0)
    def _init():
        m_sc[...] = jnp.full_like(m_sc, -jnp.inf)
        l_sc[...] = jnp.zeros_like(l_sc)
        pos_sc[...] = jnp.zeros_like(pos_sc)

    zr = zrow_ref[...]            # (TR, D), original dtype
    zc = zcol_ref[...]            # (TC, D), original dtype

    # Row pre-scaling: cosine normalization + temperature folded into the left operand.
    # (Per-row clamp of the norm at eps; differs from torch's max(|a||b|, eps) only for
    #  near-zero-norm rows.)
    zr32 = zr.astype(jnp.float32)
    zc32 = zc.astype(jnp.float32)
    inv_nr = lax.rsqrt(jnp.maximum(jnp.sum(zr32 * zr32, axis=1, keepdims=True), eps * eps))
    inv_nc = lax.rsqrt(jnp.maximum(jnp.sum(zc32 * zc32, axis=1, keepdims=True), eps * eps))
    a = (zr32 * (inv_nr * inv_temp)).astype(zr.dtype)   # keep MXU operands in input dtype
    b = (zc32 * inv_nc).astype(zc.dtype)

    # sim tile = a @ b.T without materializing a transpose: contract dim 1 of both operands.
    s = lax.dot_general(a, b, (((1,), (1,)), ((), ())),
                        preferred_element_type=jnp.float32)          # (TR, TC) f32

    row_ids = i * tr + lax.broadcasted_iota(jnp.int32, (tr, tc), 0)
    col_ids = j * tc + lax.broadcasted_iota(jnp.int32, (tr, tc), 1)

    # Structural positive column: (row + N) mod 2N  (labels are always 0 in NT-Xent).
    pos_col = jnp.where(row_ids < half, row_ids + half, row_ids - half)
    pos_sc[...] += jnp.sum(jnp.where(col_ids == pos_col, s, 0.0), axis=1, keepdims=True)

    # Exclude self-similarity from the logsumexp (the original gather drops the diagonal).
    s_masked = jnp.where(col_ids == row_ids, -jnp.inf, s)

    # Online logsumexp across column tiles.
    m_prev = m_sc[...]
    m_new = jnp.maximum(m_prev, jnp.max(s_masked, axis=1, keepdims=True))
    alpha = jnp.exp(m_prev - m_new)
    l_sc[...] = alpha * l_sc[...] + jnp.sum(jnp.exp(s_masked - m_new), axis=1, keepdims=True)
    m_sc[...] = m_new

    @pl.when(j == pl.num_programs(1) - 1)
    def _finalize():
        row_loss = m_sc[...] + jnp.log(l_sc[...]) - pos_sc[...]      # (TR, 1)
        out_ref[0, 0] = jnp.sum(row_loss) * inv_scale                # per-row-tile partial loss


def _pick_tile(n, prefs):
    for p in prefs:
        if n % p == 0:
            return p
    return n  # fall back to a single full-extent block (small / odd shapes)


def ntxent_loss(z, temperature=0.5, eps=1e-8):
    """Fused equivalent of NTXEntCriterion: compute_activations(z) -> forward(logits, zeros)."""
    n2, d = z.shape
    assert n2 % 2 == 0, "z must be the concatenation of a batch and its augmented pair"
    half = n2 // 2

    tr = _pick_tile(n2, (256, 128, 64, 32, 16, 8))     # row tile (sublane-aligned)
    tc = _pick_tile(n2, (512, 256, 128))               # col tile (lane-aligned when possible)
    grid = (n2 // tr, n2 // tc)

    kernel = functools.partial(
        _ntxent_fused_kernel,
        half=half, inv_temp=1.0 / temperature, inv_scale=1.0 / n2,
        tr=tr, tc=tc, eps=eps)

    partials = pl.pallas_call(
        kernel,
        out_shape=jax.ShapeDtypeStruct((grid[0], 1), jnp.float32),
        grid_spec=pltpu.PrefetchScalarGridSpec(
            num_scalar_prefetch=0,
            grid=grid,
            in_specs=[
                pl.BlockSpec((tr, d), lambda i, j: (i, 0)),   # row block of z
                pl.BlockSpec((tc, d), lambda i, j: (j, 0)),   # col block of z
            ],
            out_specs=pl.BlockSpec((1, 1), lambda i, j: (i, 0),
                                   memory_space=pltpu.MemorySpace.SMEM),
            scratch_shapes=[
                pltpu.VMEM((tr, 1), jnp.float32),   # running max
                pltpu.VMEM((tr, 1), jnp.float32),   # running exp-sum
                pltpu.VMEM((tr, 1), jnp.float32),   # positive accumulator
            ]),
        compiler_params=pltpu.CompilerParams(
            dimension_semantics=("parallel", "arbitrary"),
            vmem_limit_bytes=48 * 1024 * 1024),
    )(z, z)

    # Tiny final reduction over the per-row-tile partials (needed so the row axis can be parallel).
    return jnp.sum(partials)


# ---------------------------------------------------------------------------
# Pure-numpy reference mirroring the PyTorch module literally (f64)
# ---------------------------------------------------------------------------
def _reference_ntxent(z_np, temperature=0.5, eps=1e-8):
    z = np.asarray(z_np, dtype=np.float64)
    n2 = z.shape[0]
    n = n2 // 2
    norms = np.linalg.norm(z, axis=1, keepdims=True)
    denom = np.maximum(norms * norms.T, eps)
    sim = (z @ z.T) / denom / temperature
    rows = np.arange(n2)
    pos_cols = np.concatenate([np.arange(n) + n, np.arange(n)])
    positives = sim[rows, pos_cols].reshape(n2, 1)
    mask = np.ones((n2, n2), dtype=bool)
    np.fill_diagonal(mask, False)
    for i in range(n):
        mask[i, n + i] = False
        mask[n + i, i] = False
    negatives = sim[mask].reshape(n2, -1)
    logits = np.concatenate([positives, negatives], axis=1)
    m = logits.max(axis=1, keepdims=True)
    lse = m[:, 0] + np.log(np.exp(logits - m).sum(axis=1))
    return np.sum(lse - logits[:, 0]) / (2 * n)


# ---------------------------------------------------------------------------
if __name__ == "__main__":
    key = jax.random.PRNGKey(0)
    k1, k2 = jax.random.split(key)
    temperature = 0.5

    # Small shape (single tile, full-extent blocks): batch=4, feature dim=32 -> z is (8, 32)
    batch_size, feat_dim = 4, 32
    z_small = jax.random.normal(k1, (2 * batch_size, feat_dim), dtype=jnp.float32)
    loss_small = jax.block_until_ready(ntxent_loss(z_small, temperature))
    ref_small = _reference_ntxent(np.asarray(z_small), temperature)
    assert np.allclose(float(loss_small), ref_small, rtol=1e-5, atol=1e-5), (float(loss_small), ref_small)

    # Larger shape exercising the (parallel rows x arbitrary cols) grid + online logsumexp:
    # batch=512 -> z is (1024, 64), grid = (4 row tiles, 2 col tiles)
    batch_size2, feat_dim2 = 512, 64
    z_big = jax.random.normal(k2, (2 * batch_size2, feat_dim2), dtype=jnp.float32)
    loss_big = jax.block_until_ready(ntxent_loss(z_big, temperature))
    ref_big = _reference_ntxent(np.asarray(z_big), temperature)
    assert np.allclose(float(loss_big), ref_big, rtol=1e-4, atol=1e-4), (float(loss_big), ref_big)

    print("KERNEL_OK")
</pallas_src>

<mosaic_0001>
module attributes {stable_mosaic.version = 11 : i64} {
  func.func @_ntxent_fused_kernel(%arg0: i32, %arg1: i32, %arg2: memref<8x32xf32, #tpu.memory_space<vmem>>, %arg3: memref<8x32xf32, #tpu.memory_space<vmem>>, %arg4: memref<1x1xf32, #tpu.memory_space<smem>>, %arg5: memref<8x1xf32, #tpu.memory_space<vmem>>, %arg6: memref<8x1xf32, #tpu.memory_space<vmem>>, %arg7: memref<8x1xf32, #tpu.memory_space<vmem>>) attributes {dimension_semantics = [#tpu.dimension_semantics<parallel>, #tpu.dimension_semantics<arbitrary>], iteration_bounds = array<i64: 1, 1>, scalar_prefetch = 0 : i64, scratch_operands = 3 : i64, tpu.core_type = #tpu.core_type<tc>, window_params = [{transform_indices = @transform_0, window_bounds = array<i64: 8, 32>}, {transform_indices = @transform_1, window_bounds = array<i64: 8, 32>}, {transform_indices = @transform_2, window_bounds = array<i64: 1, 1>}]} {
    %c0_i32 = arith.constant 0 : i32
    %0 = arith.cmpi eq, %arg1, %c0_i32 : i32
    %1 = arith.extui %0 : i1 to i32
    %c0_i32_0 = arith.constant 0 : i32
    %2 = arith.cmpi ne, %1, %c0_i32_0 : i32
    scf.if %2 {
      %cst_31 = arith.constant 0xFF800000 : f32
      %69 = vector.broadcast %cst_31 : f32 to vector<8x1xf32>
      %c0_32 = arith.constant 0 : index
      %c0_33 = arith.constant 0 : index
      %70 = vector.load %arg5[%c0_32, %c0_33] : memref<8x1xf32, #tpu.memory_space<vmem>>, vector<8x1xf32>
      tpu.vector_store %arg5[%c0_32, %c0_33], %69 {strides = array<i32>} : memref<8x1xf32, #tpu.memory_space<vmem>>, vector<8x1xf32>,
      %cst_34 = arith.constant 0.000000e+00 : f32
      %71 = vector.broadcast %cst_34 : f32 to vector<8x1xf32>
      %c0_35 = arith.constant 0 : index
      %c0_36 = arith.constant 0 : index
      %72 = vector.load %arg6[%c0_35, %c0_36] : memref<8x1xf32, #tpu.memory_space<vmem>>, vector<8x1xf32>
      tpu.vector_store %arg6[%c0_35, %c0_36], %71 {strides = array<i32>} : memref<8x1xf32, #tpu.memory_space<vmem>>, vector<8x1xf32>,
      %cst_37 = arith.constant 0.000000e+00 : f32
      %73 = vector.broadcast %cst_37 : f32 to vector<8x1xf32>
      %c0_38 = arith.constant 0 : index
      %c0_39 = arith.constant 0 : index
      %74 = vector.load %arg7[%c0_38, %c0_39] : memref<8x1xf32, #tpu.memory_space<vmem>>, vector<8x1xf32>
      tpu.vector_store %arg7[%c0_38, %c0_39], %73 {strides = array<i32>} : memref<8x1xf32, #tpu.memory_space<vmem>>, vector<8x1xf32>,
    } else {
    }
    %c0 = arith.constant 0 : index
    %c0_1 = arith.constant 0 : index
    %3 = vector.load %arg2[%c0, %c0_1] : memref<8x32xf32, #tpu.memory_space<vmem>>, vector<8x32xf32>
    %c0_2 = arith.constant 0 : index
    %c0_3 = arith.constant 0 : index
    %4 = vector.load %arg3[%c0_2, %c0_3] : memref<8x32xf32, #tpu.memory_space<vmem>>, vector<8x32xf32>
    %5 = arith.mulf %3, %3 : vector<8x32xf32>
    %cst = arith.constant dense<0.000000e+00> : vector<8xf32>
    %6 = vector.multi_reduction <add>, %5, %cst [1] : vector<8x32xf32> to vector<8xf32>
    %7 = vector.shape_cast %6 : vector<8xf32> to vector<8x1xf32>
    %cst_4 = arith.constant 1.000000e-16 : f32
    %8 = vector.broadcast %cst_4 : f32 to vector<8x1xf32>
    %9 = arith.maximumf %7, %8 : vector<8x1xf32>
    %10 = math.rsqrt %9 : vector<8x1xf32>
    %11 = arith.mulf %4, %4 : vector<8x32xf32>
    %cst_5 = arith.constant dense<0.000000e+00> : vector<8xf32>
    %12 = vector.multi_reduction <add>, %11, %cst_5 [1] : vector<8x32xf32> to vector<8xf32>
    %13 = vector.shape_cast %12 : vector<8xf32> to vector<8x1xf32>
    %cst_6 = arith.constant 1.000000e-16 : f32
    %14 = vector.broadcast %cst_6 : f32 to vector<8x1xf32>
    %15 = arith.maximumf %13, %14 : vector<8x1xf32>
    %16 = math.rsqrt %15 : vector<8x1xf32>
    %cst_7 = arith.constant 2.000000e+00 : f32
    %17 = vector.broadcast %cst_7 : f32 to vector<8x1xf32>
    %18 = arith.mulf %10, %17 : vector<8x1xf32>
    %19 = vector.broadcast %18 : vector<8x1xf32> to vector<8x32xf32>
    %20 = arith.mulf %3, %19 : vector<8x32xf32>
    %21 = vector.broadcast %16 : vector<8x1xf32> to vector<8x32xf32>
    %22 = arith.mulf %4, %21 : vector<8x32xf32>
    %cst_8 = arith.constant dense<0.000000e+00> : vector<8x8xf32>
    %23 = tpu.matmul %20, %22, %cst_8 {dimension_numbers = #tpu.dot_dimension_numbers<[1], [1], [0], [0], [0, 0, 1, 0], [], []>} : vector<8x32xf32>, vector<8x32xf32>, vector<8x8xf32> -> vector<8x8xf32>
    %c8_i32 = arith.constant 8 : i32
    %24 = arith.muli %arg0, %c8_i32 : i32
    %25 = tpu.iota {dimensions = array<i32: 0>} : vector<8x8xi32>
    %26 = vector.broadcast %24 : i32 to vector<8x8xi32>
    %27 = arith.addi %26, %25 : vector<8x8xi32>
    %c8_i32_9 = arith.constant 8 : i32
    %28 = arith.muli %arg1, %c8_i32_9 : i32
    %29 = tpu.iota {dimensions = array<i32: 1>} : vector<8x8xi32>
    %30 = vector.broadcast %28 : i32 to vector<8x8xi32>
    %31 = arith.addi %30, %29 : vector<8x8xi32>
    %c4_i32 = arith.constant 4 : i32
    %32 = vector.broadcast %c4_i32 : i32 to vector<8x8xi32>
    %33 = arith.cmpi slt, %27, %32 : vector<8x8xi32>
    %c4_i32_10 = arith.constant 4 : i32
    %34 = vector.broadcast %c4_i32_10 : i32 to vector<8x8xi32>
    %35 = arith.addi %27, %34 : vector<8x8xi32>
    %c4_i32_11 = arith.constant 4 : i32
    %36 = vector.broadcast %c4_i32_11 : i32 to vector<8x8xi32>
    %37 = arith.subi %27, %36 : vector<8x8xi32>
    %38 = arith.select %33, %35, %37 : vector<8x8xi1>, vector<8x8xi32>
    %c0_12 = arith.constant 0 : index
    %c0_13 = arith.constant 0 : index
    %39 = vector.load %arg7[%c0_12, %c0_13] : memref<8x1xf32, #tpu.memory_space<vmem>>, vector<8x1xf32>
    %40 = arith.cmpi eq, %31, %38 : vector<8x8xi32>
    %cst_14 = arith.constant 0.000000e+00 : f32
    %41 = vector.broadcast %cst_14 : f32 to vector<8x8xf32>
    %42 = arith.select %40, %23, %41 : vector<8x8xi1>, vector<8x8xf32>
    %cst_15 = arith.constant dense<0.000000e+00> : vector<8xf32>
    %43 = vector.multi_reduction <add>, %42, %cst_15 [1] : vector<8x8xf32> to vector<8xf32>
    %44 = vector.shape_cast %43 : vector<8xf32> to vector<8x1xf32>
    %45 = arith.addf %39, %44 : vector<8x1xf32>
    %c0_16 = arith.constant 0 : index
    %c0_17 = arith.constant 0 : index
    %46 = vector.load %arg7[%c0_16, %c0_17] : memref<8x1xf32, #tpu.memory_space<vmem>>, vector<8x1xf32>
    tpu.vector_store %arg7[%c0_16, %c0_17], %45 {strides = array<i32>} : memref<8x1xf32, #tpu.memory_space<vmem>>, vector<8x1xf32>,
    %47 = arith.cmpi eq, %31, %27 : vector<8x8xi32>
    %cst_18 = arith.constant 0xFF800000 : f32
    %48 = vector.broadcast %cst_18 : f32 to vector<8x8xf32>
    %49 = arith.select %47, %48, %23 : vector<8x8xi1>, vector<8x8xf32>
    %c0_19 = arith.constant 0 : index
    %c0_20 = arith.constant 0 : index
    %50 = vector.load %arg5[%c0_19, %c0_20] : memref<8x1xf32, #tpu.memory_space<vmem>>, vector<8x1xf32>
    %cst_21 = arith.constant dense<0xFF800000> : vector<8xf32>
    %51 = vector.multi_reduction <maximumf>, %49, %cst_21 [1] : vector<8x8xf32> to vector<8xf32>
    %52 = vector.shape_cast %51 : vector<8xf32> to vector<8x1xf32>
    %53 = arith.maximumf %50, %52 : vector<8x1xf32>
    %54 = arith.subf %50, %53 : vector<8x1xf32>
    %55 = math.exp %54 : vector<8x1xf32>
    %c0_22 = arith.constant 0 : index
    %c0_23 = arith.constant 0 : index
    %56 = vector.load %arg6[%c0_22, %c0_23] : memref<8x1xf32, #tpu.memory_space<vmem>>, vector<8x1xf32>
    %57 = arith.mulf %55, %56 : vector<8x1xf32>
    %58 = vector.broadcast %53 : vector<8x1xf32> to vector<8x8xf32>
    %59 = arith.subf %49, %58 : vector<8x8xf32>
    %60 = math.exp %59 : vector<8x8xf32>
    %cst_24 = arith.constant dense<0.000000e+00> : vector<8xf32>
    %61 = vector.multi_reduction <add>, %60, %cst_24 [1] : vector<8x8xf32> to vector<8xf32>
    %62 = vector.shape_cast %61 : vector<8xf32> to vector<8x1xf32>
    %63 = arith.addf %57, %62 : vector<8x1xf32>
    %c0_25 = arith.constant 0 : index
    %c0_26 = arith.constant 0 : index
    %64 = vector.load %arg6[%c0_25, %c0_26] : memref<8x1xf32, #tpu.memory_space<vmem>>, vector<8x1xf32>
    tpu.vector_store %arg6[%c0_25, %c0_26], %63 {strides = array<i32>} : memref<8x1xf32, #tpu.memory_space<vmem>>, vector<8x1xf32>,
    %c0_27 = arith.constant 0 : index
    %c0_28 = arith.constant 0 : index
    %65 = vector.load %arg5[%c0_27, %c0_28] : memref<8x1xf32, #tpu.memory_space<vmem>>, vector<8x1xf32>
    tpu.vector_store %arg5[%c0_27, %c0_28], %53 {strides = array<i32>} : memref<8x1xf32, #tpu.memory_space<vmem>>, vector<8x1xf32>,
    %c0_i32_29 = arith.constant 0 : i32
    %66 = arith.cmpi eq, %arg1, %c0_i32_29 : i32
    %67 = arith.extui %66 : i1 to i32
    %c0_i32_30 = arith.constant 0 : i32
    %68 = arith.cmpi ne, %67, %c0_i32_30 : i32
    scf.if %68 {
      %c0_31 = arith.constant 0 : index
      %c0_32 = arith.constant 0 : index
      %69 = vector.load %arg5[%c0_31, %c0_32] : memref<8x1xf32, #tpu.memory_space<vmem>>, vector<8x1xf32>
      %c0_33 = arith.constant 0 : index
      %c0_34 = arith.constant 0 : index
      %70 = vector.load %arg6[%c0_33, %c0_34] : memref<8x1xf32, #tpu.memory_space<vmem>>, vector<8x1xf32>
      %71 = math.log %70 : vector<8x1xf32>
      %72 = arith.addf %69, %71 : vector<8x1xf32>
      %c0_35 = arith.constant 0 : index
      %c0_36 = arith.constant 0 : index
      %73 = vector.load %arg7[%c0_35, %c0_36] : memref<8x1xf32, #tpu.memory_space<vmem>>, vector<8x1xf32>
      %74 = arith.subf %72, %73 : vector<8x1xf32>
      %75 = vector.shape_cast %74 : vector<8x1xf32> to vector<1x8x1xf32>
      %cst_37 = arith.constant dense<0.000000e+00> : vector<1xf32>
      %76 = vector.multi_reduction <add>, %75, %cst_37 [1, 2] : vector<1x8x1xf32> to vector<1xf32>
      %77 = vector.shape_cast %76 : vector<1xf32> to vector<1x1x1xf32>
      %78 = vector.extract %77[0, 0, 0] : f32 from vector<1x1x1xf32>
      %cst_38 = arith.constant 1.250000e-01 : f32
      %79 = arith.mulf %78, %cst_38 : f32
      %c0_39 = arith.constant 0 : index
      %c0_40 = arith.constant 0 : index
      %80 = memref.load %arg4[%c0_39, %c0_40] : memref<1x1xf32, #tpu.memory_space<smem>>
      memref.store %79, %arg4[%c0_39, %c0_40] : memref<1x1xf32, #tpu.memory_space<smem>>
    } else {
    }
    return
  }
  func.func @transform_0(%arg0: i32, %arg1: i32) -> (i32, i32) {
    %c0_i32 = arith.constant 0 : i32
    %c0_i32_0 = arith.constant 0 : i32
    return %arg0, %c0_i32 : i32, i32
  }
  func.func @transform_1(%arg0: i32, %arg1: i32) -> (i32, i32) {
    %c0_i32 = arith.constant 0 : i32
    %c0_i32_0 = arith.constant 0 : i32
    return %arg1, %c0_i32 : i32, i32
  }
  func.func @transform_2(%arg0: i32, %arg1: i32) -> (i32, i32) {
    %c0_i32 = arith.constant 0 : i32
    %c0_i32_0 = arith.constant 0 : i32
    return %arg0, %c0_i32 : i32, i32
  }
}

</mosaic_0001>

<llo_original>
// kernel: tpu_custom_call.1
$region0: #{tpu_custom_call.1}
  #allocation0 [shape = 'u32[]', space=smem, size = 0x4, offset = 0x4, fixed_abs, tag = 'smem constant byte address 0x4 - core index']
  #allocation1 [shape = 'u32[72,128]{1,0:T(1,128)}', space=vmem, size = 0x9000, scoped, tag = 'internal scratch']
  #allocation2 [shape = 'f32[8,1]{1,0:T(8,128)}', space=vmem, size = 0x1000, scoped, tag = 'scratch operand']
  #allocation3 [shape = 'f32[8,1]{1,0:T(8,128)}', space=vmem, size = 0x1000, scoped, tag = 'scratch operand']
  #allocation4 [shape = 'f32[8,1]{1,0:T(8,128)}', space=vmem, size = 0x1000, scoped, tag = 'scratch operand']
  %s0 = inlined_call_operand.hbm [shape: f32[8,32], index: 0, kind: input, shape index: {}]
  %s1 = inlined_call_operand.hbm [shape: f32[8,32], index: 1, kind: input, shape index: {}]
  %s2 = inlined_call_operand.hbm [shape: f32[1,1], index: 2, kind: output, shape index: {}]
  %s3 = sld [smem:[#allocation0]]
  $region34: #{tpu_custom_call.1} parent=0
    _
  %s5 = ssub.s32 1, %s3
  %s6 = scalar_select 0, %s5, %s3
  $region1: #{tpu_custom_call.1} parent=0
    #allocation5 [shape = 'u8[4096]{0}', space=vmem, size = 0x1000, scoped, tag = 'input window, operand 0, single buffered']
    #allocation6 [shape = 's32[1]{0}', space=sflag, size = 0x4, scoped, tag = 'scoped memory for tpu_custom_call.1']
    #allocation7 [shape = 's32[1]{0}', space=sflag, size = 0x4, scoped, tag = 'scoped memory for tpu_custom_call.1']
    #allocation8 [shape = 'u8[4096]{0}', space=vmem, size = 0x1000, scoped, tag = 'input window, operand 1, single buffered']
    #allocation9 [shape = 's32[1]{0}', space=sflag, size = 0x4, scoped, tag = 'scoped memory for tpu_custom_call.1']
    #allocation10 [shape = 'u8[512]{0}', space=smem, size = 0x200, scoped, tag = 'output window, operand 0, single buffered']
    %7 = vsyncpa [#allocation6], 0
    %8 = vsyncpa [#allocation9], 0
    %9 = vsyncpa [#allocation7], 0
    // Predicated region
    $region2: #{tpu_custom_call.1} parent=1 // pred_check
      _
    $region3: #{tpu_custom_call.1} parent=1 // pred_check_branch
      %11 = sbr.rel (0) target = $region5
    $region4: #{tpu_custom_call.1} parent=1 // pred_region
      %13 = vsyncadd [#allocation6], 0
      %s15 = sshll.u32 %s0, 4
      %s16 = int_to_ptr.hbm [resolvable:$true] %s15
      %s17 = sshll.u32 [#allocation5], 4
      %s18 = int_to_ptr.vmem [resolvable:$true] %s17
      %20 = dma.hbm_to_vmem [thread:$0]  %s16, 128, %s18, [#allocation6]
    $region5: #{tpu_custom_call.1} parent=1 // pred_fallthru
      _
    // Predicated region
    $region6: #{tpu_custom_call.1} parent=1 // pred_check
      _
    $region7: #{tpu_custom_call.1} parent=1 // pred_check_branch
      %22 = sbr.rel (0) target = $region9
    $region8: #{tpu_custom_call.1} parent=1 // pred_region
      %24 = vsyncadd [#allocation9], 0
      %s26 = sshll.u32 %s1, 4
      %s27 = int_to_ptr.hbm [resolvable:$true] %s26
      %s28 = sshll.u32 [#allocation8], 4
      %s29 = int_to_ptr.vmem [resolvable:$true] %s28
      %31 = dma.hbm_to_vmem [thread:$0]  %s27, 128, %s29, [#allocation9]
    $region9: #{tpu_custom_call.1} parent=1 // pred_fallthru
      _
    // Predicated region
    $region10: #{tpu_custom_call.1} parent=1 // pred_check
      _
    $region11: #{tpu_custom_call.1} parent=1 // pred_check_branch
      %33 = sbr.rel (0) target = $region13
    $region12: #{tpu_custom_call.1} parent=1 // pred_region
      %35 = dma.done [#allocation6], 128
    $region13: #{tpu_custom_call.1} parent=1 // pred_fallthru
      _
    // Predicated region
    $region14: #{tpu_custom_call.1} parent=1 // pred_check
      _
    $region15: #{tpu_custom_call.1} parent=1 // pred_check_branch
      %37 = sbr.rel (0) target = $region17
    $region16: #{tpu_custom_call.1} parent=1 // pred_region
      %39 = dma.done [#allocation9], 128
    $region17: #{tpu_custom_call.1} parent=1 // pred_fallthru
      _
    %p40 = scmp.eq.s32.totalorder 0, 0
    // Predicated region
    $region18: #{tpu_custom_call.1} parent=1 // pred_check
      %p41 = pneg %p40
    $region19: #{tpu_custom_call.1} parent=1 // pred_check_branch
      %43 = sbr.rel (%p41) target = $region21
    $region20: #{tpu_custom_call.1} parent=1 // pred_region
      %vm44 = vcmask 7168
      %45 = vst.msk [vmem:[#allocation2] sm:$0xff] %vm44, -inf
      %46 = vst.msk [vmem:[#allocation3] sm:$0xff] %vm44, 0.0
      %47 = vst.msk [vmem:[#allocation4] sm:$0xff] %vm44, 0.0
    $region21: #{tpu_custom_call.1} parent=1 // pred_fallthru
      _
    %v48 = vld [vmem:[#allocation5] sm:$0xff]
    %v49 = vld [vmem:[#allocation8] sm:$0xff]
    %v50 = vmul.f32 %v48, %v48
    %vm51 = vcmask 261120
    %v52 = vsel %vm51, %v50, 0.0
    %53 = vadd.xlane.f32.xlu0 %v52
    %v54 = vpop.xlane.xlu0 %53
    %v55 = vmax.f32 %v54, 1e-16
    %v56 = vrsqrt.pop %v55
    %v57 = vmul.f32 %v56, %v55
    %v58 = vmul.f32 %v57, %v56
    %v59 = vmul.f32 0.5, %v58
    %v60 = vsub.f32 1.5, %v59
    %v61 = vmul.f32 %v56, %v60
    %vm62 = vweird.f32 %v55
    %vm63 = vweird.f32 %v56
    %vm64 = vmor %vm62, %vm63
    %v65 = vsel %vm64, %v56, %v61
    %v66 = vmul.f32 %v49, %v49
    %v67 = vsel %vm51, %v66, 0.0
    %68 = vadd.xlane.f32.xlu0 %v67
    %v69 = vpop.xlane.xlu0 %68
    %v70 = vmax.f32 %v69, 1e-16
    %v71 = vrsqrt.pop %v70
    %v72 = vmul.f32 %v71, %v70
    %v73 = vmul.f32 %v72, %v71
    %v74 = vmul.f32 0.5, %v73
    %v75 = vsub.f32 1.5, %v74
    %v76 = vmul.f32 %v71, %v75
    %vm77 = vweird.f32 %v70
    %vm78 = vweird.f32 %v71
    %vm79 = vmor %vm77, %vm78
    %v80 = vsel %vm79, %v71, %v76
    %v81 = vmul.f32 %v65, 2.0
    %v82 = vmul.f32 %v48, %v81
    %v83 = vmul.f32 %v49, %v80
    %v85 = vsel %vm51, %v82, 0
    %v88 = vsel %vm51, %v83, 0
    %90 = vmatpush.xpose.msra.mxu0 0.0
    %91 = vmatpush.xpose.msra.mxu0 0.0
    %92 = vmatpush.xpose.msra.mxu0 0.0
    %93 = vmatpush.xpose.msra.mxu0 0.0
    %94 = vmatpush.xpose.msra.mxu0 0.0
    %95 = vmatpush.xpose.msra.mxu0 0.0
    %96 = vmatpush.xpose.msra.mxu0 0.0
    %97 = vmatpush.xpose.msra.mxu0 0.0
    %98 = vmatpush.xpose.msra.mxu0 0.0
    %99 = vmatpush.xpose.msra.mxu0 0.0
    %100 = vmatpush.xpose.msra.mxu0 0.0
    %101 = vmatpush.xpose.msra.mxu0 0.0
    %102 = vmatpush.xpose.msra.mxu0 0.0
    %103 = vmatpush.xpose.msra.mxu0 0.0
    %104 = vmatpush.xpose.msra.mxu0 0.0
    %105 = vmatpush.xpose.msra.mxu0 %v88
    %106 = vmatmul.f32.gmra.mxu0 %v85
    %v107 = vpop.f32.mrf.mxu0
    %v108 = vadd.f32 0.0, %v107
    %109 = vdwg.mxu0
    %s110 = smul.u32 0, 8
    %v111 = vlaneseq
    %v112 = vshrl.u32 %v111, 7
    %v113 = vstv %s110
    %v114 = vadd.s32 %v113, %v112
    %s115 = smul.u32 0, 8
    %v116 = vlaneseq
    %v117 = vand.u32 %v116, 127
    %v118 = vstv %s115
    %v119 = vadd.s32 %v118, %v117
    %vm120 = vcmp.lt.s32.totalorder %v114, 4
    %v121 = vadd.s32 %v114, 4
    %v122 = vsub.s32 %v114, 4
    %v123 = vsel %vm120, %v121, %v122
    %v124 = vld [vmem:[#allocation4] sm:$0xff]
    %vm125 = vcmp.eq.s32.totalorder %v119, %v123
    %v126 = vsel %vm125, %v108, 0.0
    %vm127 = vcmask 64512
    %v128 = vsel %vm127, %v126, 0.0
    %129 = vadd.xlane.f32.xlu0 %v128
    %v130 = vpop.xlane.xlu0 %129
    %v131 = vadd.f32 %v124, %v130
    %vm132 = vcmask 7168
    %133 = vst.msk [vmem:[#allocation4] sm:$0xff] %vm132, %v131
    %vm134 = vcmp.eq.s32.totalorder %v119, %v114
    %v135 = vsel %vm134, -inf, %v108
    %v136 = vld [vmem:[#allocation2] sm:$0xff]
    %v137 = vsel %vm127, %v135, -inf
    %138 = vmax.xlane.f32.xlu0 %v137
    %v139 = vpop.xlane.xlu0 %138
    %v140 = vmax.f32 %v136, %v139
    %v141 = vsub.f32 %v136, %v140
    %v142 = vmul.f32 %v141, 1.442695
    %v143 = vpow.pop %v142
    %v144 = vld [vmem:[#allocation3] sm:$0xff]
    %v145 = vmul.f32 %v143, %v144
    %147 = vset.pattern.permute.xlu0 0
    %148 = vperm.xlu0 %147, %v140
    %v149 = vpop.permute.xlu0 %148
    %v151 = vsub.f32 %v135, %v149
    %v152 = vmul.f32 %v151, 1.442695
    %v153 = vpow.pop %v152
    %v154 = vsel %vm127, %v153, 0.0
    %155 = vadd.xlane.f32.xlu0 %v154
    %v156 = vpop.xlane.xlu0 %155
    %v157 = vadd.f32 %v145, %v156
    %158 = vst.msk [vmem:[#allocation3] sm:$0xff] %vm132, %v157
    %159 = vst.msk [vmem:[#allocation2] sm:$0xff] %vm132, %v140
    // Predicated region
    $region22: #{tpu_custom_call.1} parent=1 // pred_check
      %p160 = pneg %p40
    $region23: #{tpu_custom_call.1} parent=1 // pred_check_branch
      %162 = sbr.rel (%p160) target = $region25
    $region24: #{tpu_custom_call.1} parent=1 // pred_region
      %v163 = vld [vmem:[#allocation2] sm:$0xff]
      %v164 = vld [vmem:[#allocation3] sm:$0xff]
      %v165 = vlog2.pop %v164
      %v166 = vmul.f32 %v165, 0.6931472
      %v167 = vadd.f32 %v163, %v166
      %v168 = vld [vmem:[#allocation4] sm:$0xff]
      %v169 = vsub.f32 %v167, %v168
      %v170 = vsel %vm132, %v169, 0.0
      %171 = vadd.xlane.f32.xlu0 %v170
      %v172 = vpop.xlane.xlu0 %171
      %v173 = vrot.slane %v172, 4
      %v174 = vadd.f32 %v172, %v173
      %v175 = vrot.slane %v174, 2
      %v176 = vadd.f32 %v174, %v175
      %v177 = vrot.slane %v176, 1
      %v178 = vadd.f32 %v176, %v177
      %s179 = vtos %v178
      %s180 = smul.f32 %s179, 0.125
      %s181 = scalar_lea.smem [#allocation10], 0
      %182 = sst [smem:[%s181]] %s180
    $region25: #{tpu_custom_call.1} parent=1 // pred_fallthru
      _
    // Predicated region
    $region26: #{tpu_custom_call.1} parent=1 // pred_check
      _
    $region27: #{tpu_custom_call.1} parent=1 // pred_check_branch
      %184 = sbr.rel (0) target = $region29
    $region28: #{tpu_custom_call.1} parent=1 // pred_region
      %186 = vsyncadd [#allocation7], 0
      %s188 = sshll.u32 %s2, 4
      %s189 = int_to_ptr.hbm [resolvable:$true] %s188
      %191 = dma.smem_to_hbm [#allocation10], 16, %s189, [#allocation7]
    $region29: #{tpu_custom_call.1} parent=1 // pred_fallthru
      _
    // Predicated region
    $region30: #{tpu_custom_call.1} parent=1 // pred_check
      _
    $region31: #{tpu_custom_call.1} parent=1 // pred_check_branch
      %193 = sbr.rel (0) target = $region33
    $region32: #{tpu_custom_call.1} parent=1 // pred_region
      %195 = dma.done [#allocation7], 16
    $region33: #{tpu_custom_call.1} parent=1 // pred_fallthru
      _
    %196 = sfence
    %197 = vsyncpa [#allocation6], 1
    %198 = vsyncpa [#allocation9], 1
    %199 = vsyncpa [#allocation7], 1

</llo_original>
